<compile_context>
chip_gen: v7x
topology: tpu7x:2x2x1
jax: 0.10.0
libtpu: 0.0.40
codegen_flags: <defaults>
</compile_context>

<pallas_src>
import math
import functools

import jax
import jax.numpy as jnp
from jax.experimental import pallas as pl
from jax.experimental.pallas import tpu as pltpu

_MIB = 1024 * 1024
_VMEM_BUDGET = 40 * _MIB  # tile-selection budget; fits v7x's 64 MiB/TC VMEM


# ---------------------------------------------------------------------------
# Helpers
# ---------------------------------------------------------------------------
def _round_up(x, m):
    return ((x + m - 1) // m) * m


def _gelu_tanh(h):
    # PyTorch nn.GELU(approximate='tanh'), computed in f32.
    c = math.sqrt(2.0 / math.pi)
    return 0.5 * h * (1.0 + jnp.tanh(c * (h + 0.044715 * h * h * h)))


# ---------------------------------------------------------------------------
# PRIMARY PATH: fully fused  c_fc -> GELU -> c_proj  kernel
#   grid = (M/tm,); both weights VMEM-resident (constant index_map);
#   (tm, 4E) intermediate lives only in VMEM/vregs.
# ---------------------------------------------------------------------------
def _mlp_fused_kernel(x_ref, w1_ref, b1_ref, w2_ref, b2_ref, o_ref):
    x = x_ref[...].astype(jnp.bfloat16)                      # in-kernel cast
    h = jnp.dot(x, w1_ref[...], preferred_element_type=jnp.float32)
    h = _gelu_tanh(h + b1_ref[...])                          # f32 epilogue
    y = jnp.dot(h.astype(jnp.bfloat16), w2_ref[...],
                preferred_element_type=jnp.float32)
    o_ref[...] = (y + b2_ref[...]).astype(o_ref.dtype)


def _fused_vmem_bytes(tm, E, H, x_bytes, out_bytes):
    weights = 2 * (E * H + H * E) * 2        # bf16 weights, 2x for buffering
    x_blk = 2 * tm * E * x_bytes             # double-buffered x tile
    o_blk = 2 * tm * E * out_bytes           # double-buffered out tile
    inter = tm * H * (4 + 2)                 # f32 pre-act + bf16 copy
    bias = 2 * (H + E) * 4
    return weights + x_blk + o_blk + inter + bias


def _pick_fused_tm(M, E, H, x_bytes, out_bytes):
    tm = min(1024, _round_up(M, 16))
    while tm > 16 and _fused_vmem_bytes(tm, E, H, x_bytes, out_bytes) > _VMEM_BUDGET:
        tm = max(16, _round_up(tm // 2, 16))
    if _fused_vmem_bytes(tm, E, H, x_bytes, out_bytes) > _VMEM_BUDGET:
        return None  # weights themselves don't fit -> use streaming fallback
    # Give the second TensorCore (v7x) work when a single tile would cover M.
    if _round_up(M, tm) // tm == 1 and M >= 32:
        tm = _round_up((M + 1) // 2, 16)
    return tm


def _mlp_fused(x2d, w1, b1, w2, b2, *, out_dtype=jnp.float32):
    M, E = x2d.shape
    E2, H = w1.shape
    assert E == E2 and w2.shape == (H, E) and b1.shape == (H,) and b2.shape == (E,)

    x_bytes = jnp.dtype(x2d.dtype).itemsize
    out_bytes = jnp.dtype(out_dtype).itemsize
    tm = _pick_fused_tm(M, E, H, x_bytes, out_bytes)
    if tm is None:
        return None

    Mp = _round_up(M, tm)
    xp = x2d if Mp == M else jnp.pad(x2d, ((0, Mp - M), (0, 0)))
    b1r = b1.astype(jnp.float32).reshape(1, H)
    b2r = b2.astype(jnp.float32).reshape(1, E)

    est = _fused_vmem_bytes(tm, E, H, x_bytes, out_bytes)
    vmem_limit = min(56 * _MIB, max(32 * _MIB, int(est * 1.25)))

    out = pl.pallas_call(
        _mlp_fused_kernel,
        out_shape=jax.ShapeDtypeStruct((Mp, E), out_dtype),
        grid_spec=pltpu.PrefetchScalarGridSpec(
            num_scalar_prefetch=0,
            grid=(Mp // tm,),
            in_specs=[
                pl.BlockSpec((tm, E), lambda i: (i, 0)),   # x tile (streamed)
                pl.BlockSpec((E, H), lambda i: (0, 0)),    # c_fc weight (resident)
                pl.BlockSpec((1, H), lambda i: (0, 0)),    # c_fc bias
                pl.BlockSpec((H, E), lambda i: (0, 0)),    # c_proj weight (resident)
                pl.BlockSpec((1, E), lambda i: (0, 0)),    # c_proj bias
            ],
            out_specs=pl.BlockSpec((tm, E), lambda i: (i, 0)),
        ),
        compiler_params=pltpu.CompilerParams(
            dimension_semantics=("parallel",),
            vmem_limit_bytes=vmem_limit,
        ),
    )(xp, w1, b1r, w2, b2r)

    return out if Mp == M else out[:M]


# ---------------------------------------------------------------------------
# FALLBACK PATH: K-tiled linear (+ optional tanh-GELU) for weights that do
# not fit resident in VMEM.  Bias is folded into the accumulator init.
# ---------------------------------------------------------------------------
def _linear_kernel(x_ref, w_ref, b_ref, o_ref, acc_ref, *, activation):
    k = pl.program_id(2)

    @pl.when(k == 0)
    def _init():
        acc_ref[...] = jnp.broadcast_to(b_ref[...], acc_ref.shape)

    acc_ref[...] += jnp.dot(
        x_ref[...].astype(jnp.bfloat16), w_ref[...],
        preferred_element_type=jnp.float32)

    @pl.when(k == pl.num_programs(2) - 1)
    def _epilogue():
        h = acc_ref[...]
        if activation == "gelu_tanh":
            h = _gelu_tanh(h)
        o_ref[...] = h.astype(o_ref.dtype)


def linear(x, w, b, *, activation=None, out_dtype=jnp.float32,
           tm=512, tn=512, tk=1024):
    """x: (M, K) any float dtype, w: (K, N) bf16, b: (N,) -> (M, N)."""
    M, K = x.shape
    K2, N = w.shape
    assert K == K2 and b.shape == (N,)

    tm = min(tm, _round_up(M, 16))      # 16-row alignment for bf16 packing
    tn = min(tn, _round_up(N, 128))
    tk = min(tk, _round_up(K, 128))
    Mp, Np, Kp = _round_up(M, tm), _round_up(N, tn), _round_up(K, tk)

    xp = x if (Mp, Kp) == (M, K) else jnp.pad(x, ((0, Mp - M), (0, Kp - K)))
    wp = w.astype(jnp.bfloat16)
    if (Kp, Np) != (K, N):
        wp = jnp.pad(wp, ((0, Kp - K), (0, Np - N)))
    bp = b.astype(jnp.float32)
    if Np != N:
        bp = jnp.pad(bp, (0, Np - N))
    bp = bp.reshape(1, Np)

    grid = (Mp // tm, Np // tn, Kp // tk)
    kernel = functools.partial(_linear_kernel, activation=activation)

    out = pl.pallas_call(
        kernel,
        out_shape=jax.ShapeDtypeStruct((Mp, Np), out_dtype),
        grid_spec=pltpu.PrefetchScalarGridSpec(
            num_scalar_prefetch=0,
            grid=grid,
            in_specs=[
                pl.BlockSpec((tm, tk), lambda i, j, k: (i, k)),
                pl.BlockSpec((tk, tn), lambda i, j, k: (k, j)),
                pl.BlockSpec((1, tn), lambda i, j, k: (0, j)),
            ],
            out_specs=pl.BlockSpec((tm, tn), lambda i, j, k: (i, j)),
            scratch_shapes=[pltpu.VMEM((tm, tn), jnp.float32)],
        ),
        compiler_params=pltpu.CompilerParams(
            dimension_semantics=("parallel", "parallel", "arbitrary"),
            vmem_limit_bytes=48 * _MIB,
        ),
    )(xp, wp, bp)

    if (Mp, Np) != (M, N):
        out = out[:M, :N]
    return out


# ---------------------------------------------------------------------------
# MLP forward (matches torch: c_fc -> GELU(tanh) -> c_proj)
# ---------------------------------------------------------------------------
def mlp_forward(params, x, *, out_dtype=jnp.float32):
    lead, E = x.shape[:-1], x.shape[-1]
    x2 = x.reshape(-1, E)

    y = _mlp_fused(x2, params["c_fc_w"], params["c_fc_b"],
                   params["c_proj_w"], params["c_proj_b"], out_dtype=out_dtype)
    if y is None:
        # Weights too large for VMEM-resident fusion: two K-tiled passes with
        # a bf16 intermediate (halves the h HBM round trip).
        h = linear(x2, params["c_fc_w"], params["c_fc_b"],
                   activation="gelu_tanh", out_dtype=jnp.bfloat16)
        y = linear(h, params["c_proj_w"], params["c_proj_b"],
                   activation=None, out_dtype=out_dtype)
    return y.reshape(*lead, E)


# Pure-JAX reference for correctness checking.
def mlp_ref(params, x2d):
    w1 = params["c_fc_w"].astype(jnp.float32)
    w2 = params["c_proj_w"].astype(jnp.float32)
    h = x2d @ w1 + params["c_fc_b"]
    h = _gelu_tanh(h)
    return h @ w2 + params["c_proj_b"]


# ---------------------------------------------------------------------------
# Deterministic parameter init (mirrors GPT._init_weights conventions).
# Weights are stored pre-cast to bf16 in (in, out) layout so the forward pass
# does no per-call pad/cast passes.
# ---------------------------------------------------------------------------
def init_params(key, n_embd, n_layer=2):
    k1, k2, k3, k4 = jax.random.split(key, 4)
    std_proj = 0.02 * (2 * n_layer) ** -0.5   # NANOGPT_SCALE_INIT on c_proj
    # torch stores (out, in); the kernels consume (in, out) -> transpose.
    c_fc_w = (0.02 * jax.random.normal(k1, (4 * n_embd, n_embd), jnp.float32)).T
    c_proj_w = (std_proj * jax.random.normal(k2, (n_embd, 4 * n_embd),
                                             jnp.float32)).T
    return {
        "c_fc_w": c_fc_w.astype(jnp.bfloat16),
        "c_fc_b": 0.01 * jax.random.normal(k3, (4 * n_embd,), jnp.float32),
        "c_proj_w": c_proj_w.astype(jnp.bfloat16),
        "c_proj_b": 0.01 * jax.random.normal(k4, (n_embd,), jnp.float32),
    }


# ---------------------------------------------------------------------------
# Main
# ---------------------------------------------------------------------------
if __name__ == "__main__":
    B, T, E = 2, 16, 32  # small shapes consistent with the module

    key = jax.random.PRNGKey(0)
    k_params, k_x = jax.random.split(key)
    params = init_params(k_params, E)
    x = jax.random.normal(k_x, (B, T, E), jnp.float32)

    fwd = jax.jit(mlp_forward)
    y = fwd(params, x)
    jax.block_until_ready(y)

    assert y.shape == (B, T, E), y.shape
    assert bool(jnp.all(jnp.isfinite(y)))

    y_ref = mlp_ref(params, x.reshape(-1, E)).reshape(B, T, E)
    max_err = float(jnp.max(jnp.abs(y - y_ref)))
    assert max_err < 5e-2, f"max abs error {max_err}"

    print("KERNEL_OK")
</pallas_src>

<mosaic_0001>
module attributes {stable_mosaic.version = 11 : i64} {
  func.func @_mlp_fused_kernel(%arg0: i32, %arg1: memref<16x32xf32, #tpu.memory_space<vmem>>, %arg2: memref<32x128xbf16, #tpu.memory_space<vmem>>, %arg3: memref<1x128xf32, #tpu.memory_space<vmem>>, %arg4: memref<128x32xbf16, #tpu.memory_space<vmem>>, %arg5: memref<1x32xf32, #tpu.memory_space<vmem>>, %arg6: memref<16x32xf32, #tpu.memory_space<vmem>>) attributes {dimension_semantics = [#tpu.dimension_semantics<parallel>], iteration_bounds = array<i64: 2>, scalar_prefetch = 0 : i64, scratch_operands = 0 : i64, tpu.core_type = #tpu.core_type<tc>, window_params = [{transform_indices = @transform_0, window_bounds = array<i64: 16, 32>}, {pipeline_mode = #tpu.pipeline_mode<synchronous>, transform_indices = @transform_1, window_bounds = array<i64: 32, 128>}, {pipeline_mode = #tpu.pipeline_mode<synchronous>, transform_indices = @transform_2, window_bounds = array<i64: 1, 128>}, {pipeline_mode = #tpu.pipeline_mode<synchronous>, transform_indices = @transform_3, window_bounds = array<i64: 128, 32>}, {pipeline_mode = #tpu.pipeline_mode<synchronous>, transform_indices = @transform_4, window_bounds = array<i64: 1, 32>}, {transform_indices = @transform_5, window_bounds = array<i64: 16, 32>}]} {
    %c0 = arith.constant 0 : index
    %c0_0 = arith.constant 0 : index
    %0 = vector.load %arg1[%c0, %c0_0] : memref<16x32xf32, #tpu.memory_space<vmem>>, vector<16x32xf32>
    %1 = arith.truncf %0 : vector<16x32xf32> to vector<16x32xbf16>
    %c0_1 = arith.constant 0 : index
    %c0_2 = arith.constant 0 : index
    %2 = vector.load %arg2[%c0_1, %c0_2] : memref<32x128xbf16, #tpu.memory_space<vmem>>, vector<32x128xbf16>
    %cst = arith.constant dense<0.000000e+00> : vector<16x128xf32>
    %3 = tpu.matmul %1, %2, %cst {dimension_numbers = #tpu.dot_dimension_numbers<[1], [0], [0], [1], [0, 0, 1, 1], [], []>} : vector<16x32xbf16>, vector<32x128xbf16>, vector<16x128xf32> -> vector<16x128xf32>
    %c0_3 = arith.constant 0 : index
    %c0_4 = arith.constant 0 : index
    %4 = vector.load %arg3[%c0_3, %c0_4] : memref<1x128xf32, #tpu.memory_space<vmem>>, vector<1x128xf32>
    %5 = vector.broadcast %4 : vector<1x128xf32> to vector<16x128xf32>
    %6 = arith.addf %3, %5 : vector<16x128xf32>
    %cst_5 = arith.constant 5.000000e-01 : f32
    %7 = vector.broadcast %cst_5 : f32 to vector<16x128xf32>
    %8 = arith.mulf %7, %6 : vector<16x128xf32>
    %cst_6 = arith.constant 4.471500e-02 : f32
    %9 = vector.broadcast %cst_6 : f32 to vector<16x128xf32>
    %10 = arith.mulf %9, %6 : vector<16x128xf32>
    %11 = arith.mulf %10, %6 : vector<16x128xf32>
    %12 = arith.mulf %11, %6 : vector<16x128xf32>
    %13 = arith.addf %6, %12 : vector<16x128xf32>
    %cst_7 = arith.constant 0.797884583 : f32
    %14 = vector.broadcast %cst_7 : f32 to vector<16x128xf32>
    %15 = arith.mulf %14, %13 : vector<16x128xf32>
    %16 = math.tanh %15 : vector<16x128xf32>
    %cst_8 = arith.constant 1.000000e+00 : f32
    %17 = vector.broadcast %cst_8 : f32 to vector<16x128xf32>
    %18 = arith.addf %17, %16 : vector<16x128xf32>
    %19 = arith.mulf %8, %18 : vector<16x128xf32>
    %20 = arith.truncf %19 : vector<16x128xf32> to vector<16x128xbf16>
    %c0_9 = arith.constant 0 : index
    %c0_10 = arith.constant 0 : index
    %21 = vector.load %arg4[%c0_9, %c0_10] : memref<128x32xbf16, #tpu.memory_space<vmem>>, vector<128x32xbf16>
    %cst_11 = arith.constant dense<0.000000e+00> : vector<16x32xf32>
    %22 = tpu.matmul %20, %21, %cst_11 {dimension_numbers = #tpu.dot_dimension_numbers<[1], [0], [0], [1], [0, 0, 1, 1], [], []>} : vector<16x128xbf16>, vector<128x32xbf16>, vector<16x32xf32> -> vector<16x32xf32>
    %c0_12 = arith.constant 0 : index
    %c0_13 = arith.constant 0 : index
    %23 = vector.load %arg5[%c0_12, %c0_13] : memref<1x32xf32, #tpu.memory_space<vmem>>, vector<1x32xf32>
    %24 = vector.broadcast %23 : vector<1x32xf32> to vector<16x32xf32>
    %25 = arith.addf %22, %24 : vector<16x32xf32>
    %c0_14 = arith.constant 0 : index
    %c0_15 = arith.constant 0 : index
    %26 = vector.load %arg6[%c0_14, %c0_15] : memref<16x32xf32, #tpu.memory_space<vmem>>, vector<16x32xf32>
    tpu.vector_store %arg6[%c0_14, %c0_15], %25 {strides = array<i32>} : memref<16x32xf32, #tpu.memory_space<vmem>>, vector<16x32xf32>,
    return
  }
  func.func @transform_0(%arg0: i32) -> (i32, i32) {
    %c0_i32 = arith.constant 0 : i32
    %c0_i32_0 = arith.constant 0 : i32
    return %arg0, %c0_i32 : i32, i32
  }
  func.func @transform_1(%arg0: i32) -> (i32, i32) {
    %c0_i32 = arith.constant 0 : i32
    %c0_i32_0 = arith.constant 0 : i32
    %c0_i32_1 = arith.constant 0 : i32
    return %c0_i32, %c0_i32_0 : i32, i32
  }
  func.func @transform_2(%arg0: i32) -> (i32, i32) {
    %c0_i32 = arith.constant 0 : i32
    %c0_i32_0 = arith.constant 0 : i32
    %c0_i32_1 = arith.constant 0 : i32
    return %c0_i32, %c0_i32_0 : i32, i32
  }
  func.func @transform_3(%arg0: i32) -> (i32, i32) {
    %c0_i32 = arith.constant 0 : i32
    %c0_i32_0 = arith.constant 0 : i32
    %c0_i32_1 = arith.constant 0 : i32
    return %c0_i32, %c0_i32_0 : i32, i32
  }
  func.func @transform_4(%arg0: i32) -> (i32, i32) {
    %c0_i32 = arith.constant 0 : i32
    %c0_i32_0 = arith.constant 0 : i32
    %c0_i32_1 = arith.constant 0 : i32
    return %c0_i32, %c0_i32_0 : i32, i32
  }
  func.func @transform_5(%arg0: i32) -> (i32, i32) {
    %c0_i32 = arith.constant 0 : i32
    %c0_i32_0 = arith.constant 0 : i32
    return %arg0, %c0_i32 : i32, i32
  }
}

</mosaic_0001>

<llo_original>
// kernel: mlp_forward.1
$region0: #{mlp_forward.1}
  #allocation0 [shape = 'u32[]', space=smem, size = 0x4, offset = 0x4, fixed_abs, tag = 'smem constant byte address 0x4 - core index']
  #allocation1 [shape = 'u32[144,128]{1,0:T(1,128)}', space=vmem, size = 0x12000, scoped, tag = 'internal scratch']
  %s0 = inlined_call_operand.vmem [shape: f32[32,32], index: 0, kind: input, shape index: {}]
  %s1 = inlined_call_operand.vmem [shape: bf16[32,128], index: 1, kind: input, shape index: {}]
  %s2 = inlined_call_operand.vmem [shape: f32[1,128], index: 2, kind: input, shape index: {}]
  %s3 = inlined_call_operand.vmem [shape: bf16[128,32], index: 3, kind: input, shape index: {}]
  %s4 = inlined_call_operand.vmem [shape: f32[1,32], index: 4, kind: input, shape index: {}]
  %s5 = inlined_call_operand.hbm [shape: f32[32,32], index: 5, kind: output, shape index: {}]
  %s6 = sld [smem:[#allocation0]]
  $region53: #{mlp_forward.1} parent=0
    _
  %s8 = ssub.s32 1, %s6
  %s9 = scalar_select 0, %s8, %s6
  $region1: #{mlp_forward.1} parent=0
    #allocation2 [shape = 'u8[16384]{0}', space=vmem, size = 0x4000, scoped, tag = 'output window, operand 0']
    #allocation3 [shape = 's32[2]{0}', space=sflag, size = 0x8, scoped, tag = 'scoped memory for mlp_forward.1']
    %10 = vsyncpa [#allocation3], 0
    %s11 = scalar_lea.sflag [#allocation3], 1
    %12 = vsyncpa %s11, 0
    loop: start=0, step=1, limit=4
    $region2: #{mlp_forward.1} parent=1 // loop_pre_header
      _
    $region3: #{mlp_forward.1} parent=1 // loop_header
      %s14 = sphi 0, %s18
      %p15 = scmp.ge.s32.totalorder %s14, 4
      %s24 = sphi 0, %s26
      %s27 = sphi 0, %s24
      %s28 = sphi 0, %s27
      %s44 = sphi 0, %s28
      %s48 = sphi 0, %s48
      %s50 = sphi 0, %s48
      %s51 = sphi 0, %s50
      %s65 = sphi 0, %s51
      %s69 = sphi 0, %s69
      %s71 = sphi 0, %s69
      %s72 = sphi 0, %s71
      %s86 = sphi 0, %s72
      %s90 = sphi 0, %s90
      %s92 = sphi 0, %s90
      %s93 = sphi 0, %s92
      %s107 = sphi 0, %s93
      %s111 = sphi 0, %s111
      %s113 = sphi 0, %s111
      %s114 = sphi 0, %s113
      %s128 = sphi 0, %s114
      %s134 = sphi 0, %s136
      %s137 = sphi 0, %s134
      %s138 = sphi 0, %s137
      %s154 = sphi 0, %s138
    $region4: #{mlp_forward.1} parent=1 // loop_header_branch
      %17 = sbr.rel (%p15) target = $region8
    $region5: #{mlp_forward.1} parent=1 // loop_body
      %s19 = ssub.s32 %s14, 1
      %s20 = ssub.s32 %s14, 2
      %s21 = sadd.s32 %s14, 1
      %s22 = ssub.s32 %s14, %s21
      %p23 = scmp.eq.s32.totalorder %s22, 0
      %s25 = sadd.s32 %s24, 1
      %s26 = scalar_select %p23, %s24, %s25
      %p29 = pneg %p23
      %p30 = scmp.eq.s32.totalorder %s14, 1
      %p31 = por %p29, %p30
      %p32 = scmp.ne.s32.totalorder %s24, %s27
      %p33 = scmp.eq.s32.totalorder %s14, 0
      %p34 = por %p32, %p33
      %p35 = scmp.ne.s32.totalorder %s24, %s27
      %p36 = scmp.eq.s32.totalorder %s19, 1
      %p37 = por %p35, %p36
      %p38 = scmp.ne.s32.totalorder %s27, %s28
      %p39 = scmp.eq.s32.totalorder %s19, 0
      %p40 = por %p38, %p39
      %p41 = scmp.ne.s32.totalorder %s27, %s28
      %p42 = scmp.eq.s32.totalorder %s20, 1
      %p43 = por %p41, %p42
      %p45 = scmp.ne.s32.totalorder %s28, %s44
      %p46 = scmp.eq.s32.totalorder %s20, 0
      %p47 = por %p45, %p46
      %s49 = sadd.s32 %s48, 1
      %p52 = scmp.eq.s32.totalorder %s14, 1
      %p53 = scmp.ne.s32.totalorder %s48, %s50
      %p54 = scmp.eq.s32.totalorder %s14, 0
      %p55 = por %p53, %p54
      %p56 = scmp.ne.s32.totalorder %s48, %s50
      %p57 = scmp.eq.s32.totalorder %s19, 1
      %p58 = por %p56, %p57
      %p59 = scmp.ne.s32.totalorder %s50, %s51
      %p60 = scmp.eq.s32.totalorder %s19, 0
      %p61 = por %p59, %p60
      %p62 = scmp.ne.s32.totalorder %s50, %s51
      %p63 = scmp.eq.s32.totalorder %s20, 1
      %p64 = por %p62, %p63
      %p66 = scmp.ne.s32.totalorder %s51, %s65
      %p67 = scmp.eq.s32.totalorder %s20, 0
      %p68 = por %p66, %p67
      %s70 = sadd.s32 %s69, 1
      %p73 = scmp.eq.s32.totalorder %s14, 1
      %p74 = scmp.ne.s32.totalorder %s69, %s71
      %p75 = scmp.eq.s32.totalorder %s14, 0
      %p76 = por %p74, %p75
      %p77 = scmp.ne.s32.totalorder %s69, %s71
      %p78 = scmp.eq.s32.totalorder %s19, 1
      %p79 = por %p77, %p78
      %p80 = scmp.ne.s32.totalorder %s71, %s72
      %p81 = scmp.eq.s32.totalorder %s19, 0
      %p82 = por %p80, %p81
      %p83 = scmp.ne.s32.totalorder %s71, %s72
      %p84 = scmp.eq.s32.totalorder %s20, 1
      %p85 = por %p83, %p84
      %p87 = scmp.ne.s32.totalorder %s72, %s86
      %p88 = scmp.eq.s32.totalorder %s20, 0
      %p89 = por %p87, %p88
      %s91 = sadd.s32 %s90, 1
      %p94 = scmp.eq.s32.totalorder %s14, 1
      %p95 = scmp.ne.s32.totalorder %s90, %s92
      %p96 = scmp.eq.s32.totalorder %s14, 0
      %p97 = por %p95, %p96
      %p98 = scmp.ne.s32.totalorder %s90, %s92
      %p99 = scmp.eq.s32.totalorder %s19, 1
      %p100 = por %p98, %p99
      %p101 = scmp.ne.s32.totalorder %s92, %s93
      %p102 = scmp.eq.s32.totalorder %s19, 0
      %p103 = por %p101, %p102
      %p104 = scmp.ne.s32.totalorder %s92, %s93
      %p105 = scmp.eq.s32.totalorder %s20, 1
      %p106 = por %p104, %p105
      %p108 = scmp.ne.s32.totalorder %s93, %s107
      %p109 = scmp.eq.s32.totalorder %s20, 0
      %p110 = por %p108, %p109
      %s112 = sadd.s32 %s111, 1
      %p115 = scmp.eq.s32.totalorder %s14, 1
      %p116 = scmp.ne.s32.totalorder %s111, %s113
      %p117 = scmp.eq.s32.totalorder %s14, 0
      %p118 = por %p116, %p117
      %p119 = scmp.ne.s32.totalorder %s111, %s113
      %p120 = scmp.eq.s32.totalorder %s19, 1
      %p121 = por %p119, %p120
      %p122 = scmp.ne.s32.totalorder %s113, %s114
      %p123 = scmp.eq.s32.totalorder %s19, 0
      %p124 = por %p122, %p123
      %p125 = scmp.ne.s32.totalorder %s113, %s114
      %p126 = scmp.eq.s32.totalorder %s20, 1
      %p127 = por %p125, %p126
      %p129 = scmp.ne.s32.totalorder %s114, %s128
      %p130 = scmp.eq.s32.totalorder %s20, 0
      %p131 = por %p129, %p130
      %s132 = ssub.s32 %s14, %s21
      %p133 = scmp.eq.s32.totalorder %s132, 0
      %s135 = sadd.s32 %s134, 1
      %s136 = scalar_select %p133, %s134, %s135
      %p139 = pneg %p133
      %p140 = scmp.eq.s32.totalorder %s14, 1
      %p141 = por %p139, %p140
      %p142 = scmp.ne.s32.totalorder %s134, %s137
      %p143 = scmp.eq.s32.totalorder %s14, 0
      %p144 = por %p142, %p143
      %p145 = scmp.ne.s32.totalorder %s134, %s137
      %p146 = scmp.eq.s32.totalorder %s19, 1
      %p147 = por %p145, %p146
      %p148 = scmp.ne.s32.totalorder %s137, %s138
      %p149 = scmp.eq.s32.totalorder %s19, 0
      %p150 = por %p148, %p149
      %p151 = scmp.ne.s32.totalorder %s137, %s138
      %p152 = scmp.eq.s32.totalorder %s20, 1
      %p153 = por %p151, %p152
      %p155 = scmp.ne.s32.totalorder %s138, %s154
      %p156 = scmp.eq.s32.totalorder %s20, 0
      %p157 = por %p155, %p156
      %p158 = scmp.le.s32.totalorder 1, %s14
      %p159 = scmp.lt.s32.totalorder %s14, 3
      %p160 = pnand %p158, %p159
      %p161 = pneg %p160
      // Predicated region
      $region9: #{mlp_forward.1} parent=5 // pred_check
        _
      $region10: #{mlp_forward.1} parent=5 // pred_check_branch
        %163 = sbr.rel (%p160) target = $region12
      $region11: #{mlp_forward.1} parent=5 // pred_region
        %s164 = ssub.s32 %s14, 1
        // Predicated region
        $region13: #{mlp_forward.1} parent=11 // pred_check
          %p165 = pneg %p61
        $region14: #{mlp_forward.1} parent=11 // pred_check_branch
          %167 = sbr.rel (%p165) target = $region16
        $region15: #{mlp_forward.1} parent=11 // pred_region
          _
        $region16: #{mlp_forward.1} parent=11 // pred_fallthru
          _
        // Predicated region
        $region17: #{mlp_forward.1} parent=11 // pred_check
          %p168 = pneg %p82
        $region18: #{mlp_forward.1} parent=11 // pred_check_branch
          %170 = sbr.rel (%p168) target = $region20
        $region19: #{mlp_forward.1} parent=11 // pred_region
          _
        $region20: #{mlp_forward.1} parent=11 // pred_fallthru
          _
        // Predicated region
        $region21: #{mlp_forward.1} parent=11 // pred_check
          %p171 = pneg %p103
        $region22: #{mlp_forward.1} parent=11 // pred_check_branch
          %173 = sbr.rel (%p171) target = $region24
        $region23: #{mlp_forward.1} parent=11 // pred_region
          _
        $region24: #{mlp_forward.1} parent=11 // pred_fallthru
          _
        // Predicated region
        $region25: #{mlp_forward.1} parent=11 // pred_check
          %p174 = pneg %p124
        $region26: #{mlp_forward.1} parent=11 // pred_check_branch
          %176 = sbr.rel (%p174) target = $region28
        $region27: #{mlp_forward.1} parent=11 // pred_region
          _
        $region28: #{mlp_forward.1} parent=11 // pred_fallthru
          _
      $region12: #{mlp_forward.1} parent=5 // pred_fallthru
        _
      %p177 = scmp.lt.s32.totalorder %s14, 2
      // Predicated region
      $region29: #{mlp_forward.1} parent=5 // pred_check
        %p178 = pneg %p177
      $region30: #{mlp_forward.1} parent=5 // pred_check_branch
        %180 = sbr.rel (%p178) target = $region32
      $region31: #{mlp_forward.1} parent=5 // pred_region
        // Predicated region
        $region33: #{mlp_forward.1} parent=31 // pred_check
          %p181 = pneg %p34
        $region34: #{mlp_forward.1} parent=31 // pred_check_branch
          %183 = sbr.rel (%p181) target = $region36
        $region35: #{mlp_forward.1} parent=31 // pred_region
          %s184 = smul.u32 2, %s14
          %p185 = scmp.lt.s32.totalorder %s184, 3
          %s186 = scalar_select %p185, %s184, 3
          %s187 = smul.addr %s186, 8
          %s188 = scalar_lea.vmem %s0, %s187
          %s189 = smul.u32 2, %s14
        $region36: #{mlp_forward.1} parent=31 // pred_fallthru
          _
      $region32: #{mlp_forward.1} parent=5 // pred_fallthru
        _
      %p190 = scmp.le.s32.totalorder 1, %s14
      %p191 = scmp.lt.s32.totalorder %s14, 3
      %p192 = pnand %p190, %p191
      %p193 = pneg %p192
      // Predicated region
      $region37: #{mlp_forward.1} parent=5 // pred_check
        _
      $region38: #{mlp_forward.1} parent=5 // pred_check_branch
        %195 = sbr.rel (%p192) target = $region40
      $region39: #{mlp_forward.1} parent=5 // pred_region
        %s196 = ssub.s32 %s14, 1
        %s197 = smul.u32 2, %s19
        %p198 = scmp.lt.s32.totalorder %s197, 3
        %s199 = scalar_select %p198, %s197, 3
        %s200 = smul.addr %s199, 8
        %s201 = scalar_lea.vmem %s0, %s200
        %p202 = pneg %p40
        %p203 = pneg %p37
        %p204 = pneg %p61
        %p205 = pneg %p58
        %p206 = pneg %p82
        %p207 = pneg %p79
        %p208 = pneg %p103
        %p209 = pneg %p100
        %p210 = pneg %p124
        %p211 = pneg %p121
        %p212 = pneg %p150
        %p213 = pneg %p147
        %s214 = sand.u32 %s137, 1
        %s215 = scalar_lea.sflag [#allocation3], %s214
        %s216 = sand.u32 %s137, 1
        %s217 = smul.addr %s216, 16
        %s218 = scalar_lea.vmem [#allocation2], %s217
        %s219 = smul.u32 2, %s19
        %p220 = scmp.lt.s32.totalorder %s219, 3
        %s221 = scalar_select %p220, %s219, 3
        %s222 = smul.addr %s221, 8
        %s223 = scalar_lea.vmem %s0, %s222
        %s224 = smul.u32 2, %s19
        %s225 = smul.u32 2, %s19
        %v227 = vld [vmem:[%s223] sm:$0xff]
        %v228 = vld [vmem:[%s223 + $0x8] sm:$0xff]
        %v229 = vpack.c.bf16 %v228, %v227
        %v230 = vld [vmem:[%s1] sm:$0xf]
        %v231 = vld [vmem:[%s1 + $0x4] sm:$0xf]
        %v232 = vld [vmem:[%s1 + $0x8] sm:$0xf]
        %v233 = vld [vmem:[%s1 + $0xc] sm:$0xf]
        %v234 = vld [vmem:[%s2] sm:$0x1]
        %v236 = vlaneseq
        %v237 = vshrl.u32 %v236, 7
        %v238 = vsub.s32 0, %v237
        %v239 = vrot.slane %v234, %v238
        %v245 = vunpack.c.l.b16 %v230
        %v246 = vunpack.c.l.b16 %v231
        %v247 = vunpack.c.l.b16 %v232
        %v248 = vunpack.c.l.b16 %v233
        %v249 = vpack.c.b16 %v246, %v245
        %v250 = vpack.c.b16 %v248, %v247
        %vm253 = vcmask 261120
        %v255 = vsel %vm253, %v229, 0
        %257 = vmatprep.subr.bf16.mxu0 0
        %258 = vmatpush1.bf16.msra.mxu0 %v249
        %259 = vmatprep.subr.bf16.mxu0 0
        %260 = vmatpush1.bf16.msra.mxu0 %v250
        %261 = vmatprep.subr.bf16.mxu0 0
        %262 = vmatpush1.bf16.msra.mxu0 0
        %263 = vmatprep.subr.bf16.mxu0 0
        %264 = vmatpush1.bf16.msra.mxu0 0
        %265 = vmatprep.subr.bf16.mxu0 0
        %266 = vmatpush1.bf16.msra.mxu0 0
        %267 = vmatprep.subr.bf16.mxu0 0
        %268 = vmatpush1.bf16.msra.mxu0 0
        %269 = vmatprep.subr.bf16.mxu0 0
        %270 = vmatpush1.bf16.msra.mxu0 0
        %271 = vmatprep.subr.bf16.mxu0 0
        %272 = vmatpush1.bf16.msra.mxu0 0
        %273 = vmatprep.subr.bf16.mxu0 0
        %274 = vmatpush1.bf16.msra.mxu0 0
        %275 = vmatprep.subr.bf16.mxu0 0
        %276 = vmatpush1.bf16.msra.mxu0 0
        %277 = vmatprep.subr.bf16.mxu0 0
        %278 = vmatpush1.bf16.msra.mxu0 0
        %279 = vmatprep.subr.bf16.mxu0 0
        %280 = vmatpush1.bf16.msra.mxu0 0
        %281 = vmatprep.subr.bf16.mxu0 0
        %282 = vmatpush1.bf16.msra.mxu0 0
        %283 = vmatprep.subr.bf16.mxu0 0
        %284 = vmatpush1.bf16.msra.mxu0 0
        %285 = vmatprep.subr.bf16.mxu0 0
        %286 = vmatpush1.bf16.msra.mxu0 0
        %287 = vmatprep.subr.bf16.mxu0 0
        %288 = vmatpush1.bf16.msra.mxu0 0
        %289 = vmatprep.mubr.bf16.mxu0 0
        %290 = vmatmul.mubr.bf16.gmra.mrb[0].mxu0 %v255
        %v291 = vpop.f32.mrb[0].mxu0
        %v292 = vadd.f32 %v239, %v291
        %v293 = vpop.f32.mrb[0].mxu0
        %v294 = vpop.f32.mrb[0].mxu0
        %v295 = vadd.f32 %v239, %v294
        %v296 = vpop.f32.mrb[0].mxu0
        %297 = vdwg.mxu0
        %v298 = vmul.f32 %v292, 0.5
        %v299 = vmul.f32 %v295, 0.5
        %v300 = vmul.f32 %v292, 0.044715
        %v301 = vmul.f32 %v295, 0.044715
        %v302 = vmul.f32 %v300, %v292
        %v303 = vmul.f32 %v301, %v295
        %v304 = vmul.f32 %v302, %v292
        %v305 = vmul.f32 %v303, %v295
        %v306 = vadd.f32 %v292, %v304
        %v307 = vadd.f32 %v295, %v305
        %v308 = vmul.f32 %v306, 0.7978846
        %v309 = vmul.f32 %v307, 0.7978846
        %v310 = vtanh.pop %v308
        %v311 = vtanh.pop %v309
        %v312 = vadd.f32 %v310, 1.0
        %v313 = vadd.f32 %v311, 1.0
        %v314 = vmul.f32 %v298, %v312
        %v315 = vmul.f32 %v299, %v313
        %v316 = vpack.c.bf16 %v315, %v314
        %v317 = vld [vmem:[%s3] sm:$0xf]
        %v318 = vld [vmem:[%s3 + $0x4] sm:$0xf]
        %v319 = vld [vmem:[%s3 + $0x8] sm:$0xf]
        %v320 = vld [vmem:[%s3 + $0xc] sm:$0xf]
        %v321 = vld [vmem:[%s3 + $0x10] sm:$0xf]
        %v322 = vld [vmem:[%s3 + $0x14] sm:$0xf]
        %v323 = vld [vmem:[%s3 + $0x18] sm:$0xf]
        %v324 = vld [vmem:[%s3 + $0x1c] sm:$0xf]
        %v325 = vld [vmem:[%s3 + $0x20] sm:$0xf]
        %v326 = vld [vmem:[%s3 + $0x24] sm:$0xf]
        %v327 = vld [vmem:[%s3 + $0x28] sm:$0xf]
        %v328 = vld [vmem:[%s3 + $0x2c] sm:$0xf]
        %v329 = vld [vmem:[%s3 + $0x30] sm:$0xf]
        %v330 = vld [vmem:[%s3 + $0x34] sm:$0xf]
        %v331 = vld [vmem:[%s3 + $0x38] sm:$0xf]
        %v332 = vld [vmem:[%s3 + $0x3c] sm:$0xf]
        %v333 = vld [vmem:[%s4] sm:$0x1]
        %v335 = vlaneseq
        %v336 = vshrl.u32 %v335, 7
        %v337 = vsub.s32 0, %v336
        %v338 = vrot.slane %v333, %v337
        %v356 = vunpack.c.l.b16 %v317
        %v357 = vunpack.c.l.b16 %v318
        %v358 = vunpack.c.l.b16 %v319
        %v359 = vunpack.c.l.b16 %v320
        %v360 = vunpack.c.l.b16 %v321
        %v361 = vunpack.c.l.b16 %v322
        %v362 = vunpack.c.l.b16 %v323
        %v363 = vunpack.c.l.b16 %v324
        %v364 = vunpack.c.l.b16 %v325
        %v365 = vunpack.c.l.b16 %v326
        %v366 = vunpack.c.l.b16 %v327
        %v367 = vunpack.c.l.b16 %v328
        %v368 = vunpack.c.l.b16 %v329
        %v369 = vunpack.c.l.b16 %v330
        %v370 = vunpack.c.l.b16 %v331
        %v371 = vunpack.c.l.b16 %v332
        %v372 = vpack.c.b16 %v357, %v356
        %v373 = vpack.c.b16 %v359, %v358
        %v374 = vpack.c.b16 %v361, %v360
        %v375 = vpack.c.b16 %v363, %v362
        %v376 = vpack.c.b16 %v365, %v364
        %v377 = vpack.c.b16 %v367, %v366
        %v378 = vpack.c.b16 %v369, %v368
        %v379 = vpack.c.b16 %v371, %v370
        %388 = vmatprep.subr.bf16.mxu0 0
        %389 = vmatpush1.bf16.msra.mxu0 %v372
        %390 = vmatprep.subr.bf16.mxu0 0
        %391 = vmatpush1.bf16.msra.mxu0 %v373
        %392 = vmatprep.subr.bf16.mxu0 0
        %393 = vmatpush1.bf16.msra.mxu0 %v374
        %394 = vmatprep.subr.bf16.mxu0 0
        %395 = vmatpush1.bf16.msra.mxu0 %v375
        %396 = vmatprep.subr.bf16.mxu0 0
        %397 = vmatpush1.bf16.msra.mxu0 %v376
        %398 = vmatprep.subr.bf16.mxu0 0
        %399 = vmatpush1.bf16.msra.mxu0 %v377
        %400 = vmatprep.subr.bf16.mxu0 0
        %401 = vmatpush1.bf16.msra.mxu0 %v378
        %402 = vmatprep.subr.bf16.mxu0 0
        %403 = vmatpush1.bf16.msra.mxu0 %v379
        %404 = vmatprep.subr.bf16.mxu0 0
        %405 = vmatpush1.bf16.msra.mxu0 0
        %406 = vmatprep.subr.bf16.mxu0 0
        %407 = vmatpush1.bf16.msra.mxu0 0
        %408 = vmatprep.subr.bf16.mxu0 0
        %409 = vmatpush1.bf16.msra.mxu0 0
        %410 = vmatprep.subr.bf16.mxu0 0
        %411 = vmatpush1.bf16.msra.mxu0 0
        %412 = vmatprep.subr.bf16.mxu0 0
        %413 = vmatpush1.bf16.msra.mxu0 0
        %414 = vmatprep.subr.bf16.mxu0 0
        %415 = vmatpush1.bf16.msra.mxu0 0
        %416 = vmatprep.subr.bf16.mxu0 0
        %417 = vmatpush1.bf16.msra.mxu0 0
        %418 = vmatprep.subr.bf16.mxu0 0
        %419 = vmatpush1.bf16.msra.mxu0 0
        %420 = vmatprep.mubr.bf16.mxu0 0
        %421 = vmatmul.mubr.bf16.gmra.mrb[0].mxu0 %v316
        %v422 = vpop.f32.mrb[0].mxu0
        %v423 = vadd.f32 %v338, %v422
        %v424 = vpop.f32.mrb[0].mxu0
        %v425 = vpop.f32.mrb[0].mxu0
        %v426 = vadd.f32 %v338, %v425
        %v427 = vpop.f32.mrb[0].mxu0
        %428 = vdwg.mxu0
        %429 = vst.msk [vmem:[%s218] sm:$0xff] %vm253, %v423
        %430 = vst.msk [vmem:[%s218 + $0x8] sm:$0xff] %vm253, %v426
        %s431 = sand.u32 %s137, 1
        %s432 = scalar_lea.sflag [#allocation3], %s431
        %s433 = sand.u32 %s137, 1
        %s434 = smul.addr %s433, 16
        %s435 = scalar_lea.vmem [#allocation2], %s434
        // Predicated region
        $region41: #{mlp_forward.1} parent=39 // pred_check
          %p436 = pneg %p147
        $region42: #{mlp_forward.1} parent=39 // pred_check_branch
          %438 = sbr.rel (%p436) target = $region44
        $region43: #{mlp_forward.1} parent=39 // pred_region
          %s439 = smul.u32 2, %s19
          %s441 = ssub.s32 256, 256
          %442 = vsyncadd %s432, %s441
          %s443 = smul.addr %s439, 128
          %s444 = scalar_lea.hbm %s5, %s443
          %s445 = sshll.u32 %s435, 4
          %s446 = int_to_ptr.vmem [resolvable:$true] %s445
          %451 = dma.vmem_to_hbm [thread:$0]  %s446, 256, %s444, %s432, 128, 128, 8
        $region44: #{mlp_forward.1} parent=39 // pred_fallthru
          _
      $region40: #{mlp_forward.1} parent=5 // pred_fallthru
        _
      %p452 = scmp.le.s32.totalorder 2, %s14
      // Predicated region
      $region45: #{mlp_forward.1} parent=5 // pred_check
        %p453 = pneg %p452
      $region46: #{mlp_forward.1} parent=5 // pred_check_branch
        %455 = sbr.rel (%p453) target = $region48
      $region47: #{mlp_forward.1} parent=5 // pred_region
        %s456 = ssub.s32 %s14, 2
        // Predicated region
        $region49: #{mlp_forward.1} parent=47 // pred_check
          %p457 = pneg %p153
        $region50: #{mlp_forward.1} parent=47 // pred_check_branch
          %459 = sbr.rel (%p457) target = $region52
        $region51: #{mlp_forward.1} parent=47 // pred_region
          %s460 = sand.u32 %s138, 1
          %s461 = scalar_lea.sflag [#allocation3], %s460
          %s462 = sand.u32 %s138, 1
          %s463 = smul.addr %s462, 16
          %s464 = scalar_lea.vmem [#allocation2], %s463
          %465 = dma.done %s461, 256
        $region52: #{mlp_forward.1} parent=47 // pred_fallthru
          _
      $region48: #{mlp_forward.1} parent=5 // pred_fallthru
        _
    $region6: #{mlp_forward.1} parent=1 // loop_footer
      %s18 = sadd.s32 1, %s14
    $region7: #{mlp_forward.1} parent=1 // loop_footer_branch
      %13 = sbr.rel target = $region3
    $region8: #{mlp_forward.1} parent=1 // loop_exit
      _
    %466 = vsyncpa [#allocation3], 1
    %s467 = scalar_lea.sflag [#allocation3], 1
    %468 = vsyncpa %s467, 1

</llo_original>
